<compile_context>
chip_gen: v5e
topology: v5e:2x2
jax: 0.10.0
libtpu: 0.0.40
codegen_flags: <defaults>
</compile_context>

<pallas_src>
import math

import jax
import jax.numpy as jnp
from jax.experimental import pallas as pl
from jax.experimental.pallas import tpu as pltpu


def _round_up(x, m):
    return ((x + m - 1) // m) * m


# -----------------------------------------------------------------------------
# Pallas kernel: projection (matmul + bias) fused with LayerNorm over embed_dim
# -----------------------------------------------------------------------------
def _proj_ln_kernel(p_ref, w_ref, pb_ref, o_ref):
    # p_ref:  (TM, K)  bf16 im2col patch tile (features ordered (kh, kw, C))
    # w_ref:  (K, D)   bf16 reordered conv weight, resident
    # pb_ref: (3, D)   f32  [conv bias; LN gamma; LN beta], resident
    # o_ref:  (TM, D)  bf16 output tokens
    x = jnp.dot(p_ref[...], w_ref[...], preferred_element_type=jnp.float32)
    x = x + pb_ref[0:1, :]

    # LayerNorm over embed_dim (biased variance, nn.LayerNorm default eps).
    eps = 1e-5
    mean = jnp.mean(x, axis=-1, keepdims=True)
    centered = x - mean
    var = jnp.mean(centered * centered, axis=-1, keepdims=True)
    x_norm = centered * jax.lax.rsqrt(var + eps)
    o_ref[...] = (x_norm * pb_ref[1:2, :] + pb_ref[2:3, :]).astype(o_ref.dtype)


def _im2col_nhwc(x_nhwc, patch_size, stride, pad_h, pad_w):
    """Extract overlapping patches from an NHWC tensor with feature ordering
    (kh, kw, C) — no big transpose is needed to get tokens-major layout."""
    B, H, W, C = x_nhwc.shape
    ph, pw = patch_size
    H_out = (H + 2 * pad_h - ph) // stride + 1
    W_out = (W + 2 * pad_w - pw) // stride + 1
    xp = jnp.pad(x_nhwc, ((0, 0), (pad_h, pad_h), (pad_w, pad_w), (0, 0)))
    pieces = []
    for i in range(ph):
        for j in range(pw):
            pieces.append(
                xp[:, i : i + stride * H_out : stride, j : j + stride * W_out : stride, :]
            )
    # (B, H_out, W_out, ph*pw, C) -> (B*N, ph*pw*C); reshape is layout-preserving.
    patches = jnp.stack(pieces, axis=3)
    patches = patches.reshape(B * H_out * W_out, ph * pw * C)
    return patches, H_out, W_out


def overlap_patch_embed(x, conv_w, conv_b, ln_w, ln_b, *, patch_size, stride):
    """Forward of OverlapPatchEmbed.

    x:      (B, C, H, W)  float32, NCHW like PyTorch
    conv_w: (D, C, kh, kw)
    conv_b: (D,)
    ln_w:   (D,)
    ln_b:   (D,)
    returns (tokens, H_out, W_out) with tokens of shape (B, H_out*W_out, D) in bf16.
    """
    B, C, H, W = x.shape
    D = conv_w.shape[0]
    ph, pw = patch_size
    pad_h, pad_w = ph // 2, pw // 2  # matches nn.Conv2d padding=(ph//2, pw//2)

    # NHWC + bf16 once (small input), then im2col with C fastest -> no big
    # transpose of the patch matrix and half the HBM traffic of an f32 im2col.
    x_nhwc = jnp.transpose(x, (0, 2, 3, 1)).astype(jnp.bfloat16)
    patches, H_out, W_out = _im2col_nhwc(x_nhwc, (ph, pw), stride, pad_h, pad_w)
    M, K = patches.shape  # K = ph*pw*C

    # Row tile: large enough to amortize the ~0.35us per-grid-step overhead;
    # double-buffered (TM,K)+(TM,D) bf16 tiles stay ~2 MiB even at TM=2048.
    TM = min(2048, _round_up(M, 8))
    n_tiles = pl.cdiv(M, TM)

    # Reorder PyTorch (D, C, kh, kw) weight to match (kh, kw, C) patch features.
    w_flat = jnp.transpose(conv_w, (2, 3, 1, 0)).reshape(K, D).astype(jnp.bfloat16)
    # Fold conv bias / LN gamma / LN beta into one resident (3, D) f32 tile.
    params = jnp.stack([conv_b, ln_w, ln_b], axis=0).astype(jnp.float32)

    cost = pl.CostEstimate(
        flops=2 * M * K * D,
        transcendentals=M,  # one rsqrt per token row
        bytes_accessed=M * K * 2 + K * D * 2 + M * D * 2 + 3 * D * 4,
    )

    out = pl.pallas_call(
        _proj_ln_kernel,
        out_shape=jax.ShapeDtypeStruct((M, D), jnp.bfloat16),
        grid=(n_tiles,),
        in_specs=[
            pl.BlockSpec((TM, K), lambda i: (i, 0)),  # patch tile, pipelined over M
            pl.BlockSpec((K, D), lambda i: (0, 0)),   # weights resident
            pl.BlockSpec((3, D), lambda i: (0, 0)),   # bias/gamma/beta resident
        ],
        out_specs=pl.BlockSpec((TM, D), lambda i: (i, 0)),
        compiler_params=pltpu.CompilerParams(
            dimension_semantics=("parallel",),  # megacore-shard row tiles (v7x)
        ),
        cost_estimate=cost,
    )(patches, w_flat, params)

    tokens = out.reshape(B, H_out * W_out, D)  # free reshape (no slice pass)
    return tokens, H_out, W_out


if __name__ == "__main__":
    # Small shapes consistent with the module's forward.
    B, C, HW = 2, 4, 16
    patch_size = (7, 7)
    stride = 4
    embed_dim = 32

    key = jax.random.PRNGKey(0)
    kx, kw = jax.random.split(key)

    x = jax.random.normal(kx, (B, C, HW, HW), dtype=jnp.float32)

    # Deterministic parameter init mirroring the module's _init_weights:
    # Conv2d: normal(0, sqrt(2/fan_out)), fan_out = kh*kw*out_channels; bias 0.
    fan_out = patch_size[0] * patch_size[1] * embed_dim
    conv_w = jax.random.normal(
        kw, (embed_dim, C, patch_size[0], patch_size[1]), dtype=jnp.float32
    ) * math.sqrt(2.0 / fan_out)
    conv_b = jnp.zeros((embed_dim,), dtype=jnp.float32)
    # LayerNorm: weight 1, bias 0.
    ln_w = jnp.ones((embed_dim,), dtype=jnp.float32)
    ln_b = jnp.zeros((embed_dim,), dtype=jnp.float32)

    tokens, H_out, W_out = overlap_patch_embed(
        x, conv_w, conv_b, ln_w, ln_b, patch_size=patch_size, stride=stride
    )
    tokens = jax.block_until_ready(tokens)

    # Shape checks: (B, H_out*W_out, embed_dim).
    assert tokens.shape == (B, H_out * W_out, embed_dim), tokens.shape
    assert H_out == (HW + 2 * (patch_size[0] // 2) - patch_size[0]) // stride + 1

    # Correctness vs. an independent f32 reference (lax conv + LayerNorm).
    ref_conv = jax.lax.conv_general_dilated(
        x,
        conv_w,
        window_strides=(stride, stride),
        padding=((patch_size[0] // 2,) * 2, (patch_size[1] // 2,) * 2),
        dimension_numbers=("NCHW", "OIHW", "NCHW"),
    ) + conv_b[None, :, None, None]
    ref = jnp.transpose(ref_conv.reshape(B, embed_dim, -1), (0, 2, 1))  # (B, N, D)
    mean = ref.mean(-1, keepdims=True)
    var = ((ref - mean) ** 2).mean(-1, keepdims=True)
    ref = (ref - mean) * jax.lax.rsqrt(var + 1e-5) * ln_w + ln_b

    max_err = float(jnp.max(jnp.abs(tokens.astype(jnp.float32) - ref)))
    assert max_err < 0.1, f"max abs err {max_err}"

    print("KERNEL_OK")
</pallas_src>

<mosaic_0001>
module attributes {stable_mosaic.version = 11 : i64} {
  func.func @_proj_ln_kernel(%arg0: i32, %arg1: memref<32x196xbf16, #tpu.memory_space<vmem>>, %arg2: memref<196x32xbf16, #tpu.memory_space<vmem>>, %arg3: memref<3x32xf32, #tpu.memory_space<vmem>>, %arg4: memref<32x32xbf16, #tpu.memory_space<vmem>>) attributes {dimension_semantics = [#tpu.dimension_semantics<parallel>], iteration_bounds = array<i64: 1>, scalar_prefetch = 0 : i64, scratch_operands = 0 : i64, tpu.core_type = #tpu.core_type<tc>, window_params = [{transform_indices = @transform_0, window_bounds = array<i64: 32, 196>}, {pipeline_mode = #tpu.pipeline_mode<synchronous>, transform_indices = @transform_1, window_bounds = array<i64: 196, 32>}, {pipeline_mode = #tpu.pipeline_mode<synchronous>, transform_indices = @transform_2, window_bounds = array<i64: 3, 32>}, {transform_indices = @transform_3, window_bounds = array<i64: 32, 32>}]} {
    %c0 = arith.constant 0 : index
    %c0_0 = arith.constant 0 : index
    %0 = vector.load %arg1[%c0, %c0_0] : memref<32x196xbf16, #tpu.memory_space<vmem>>, vector<32x196xbf16>
    %c0_1 = arith.constant 0 : index
    %c0_2 = arith.constant 0 : index
    %1 = vector.load %arg2[%c0_1, %c0_2] : memref<196x32xbf16, #tpu.memory_space<vmem>>, vector<196x32xbf16>
    %cst = arith.constant dense<0.000000e+00> : vector<32x32xf32>
    %2 = tpu.matmul %0, %1, %cst {dimension_numbers = #tpu.dot_dimension_numbers<[1], [0], [0], [1], [0, 0, 1, 1], [], []>} : vector<32x196xbf16>, vector<196x32xbf16>, vector<32x32xf32> -> vector<32x32xf32>
    %c0_3 = arith.constant 0 : index
    %c0_4 = arith.constant 0 : index
    %3 = vector.load %arg3[%c0_3, %c0_4] : memref<3x32xf32, #tpu.memory_space<vmem>>, vector<1x32xf32>
    %4 = vector.broadcast %3 : vector<1x32xf32> to vector<32x32xf32>
    %5 = arith.addf %2, %4 : vector<32x32xf32>
    %cst_5 = arith.constant dense<0.000000e+00> : vector<32xf32>
    %6 = vector.multi_reduction <add>, %5, %cst_5 [1] : vector<32x32xf32> to vector<32xf32>
    %7 = vector.shape_cast %6 : vector<32xf32> to vector<32x1xf32>
    %cst_6 = arith.constant 3.200000e+01 : f32
    %8 = vector.broadcast %cst_6 : f32 to vector<32x1xf32>
    %9 = arith.divf %7, %8 : vector<32x1xf32>
    %10 = vector.broadcast %9 : vector<32x1xf32> to vector<32x32xf32>
    %11 = arith.subf %5, %10 : vector<32x32xf32>
    %12 = arith.mulf %11, %11 : vector<32x32xf32>
    %cst_7 = arith.constant dense<0.000000e+00> : vector<32xf32>
    %13 = vector.multi_reduction <add>, %12, %cst_7 [1] : vector<32x32xf32> to vector<32xf32>
    %14 = vector.shape_cast %13 : vector<32xf32> to vector<32x1xf32>
    %cst_8 = arith.constant 3.200000e+01 : f32
    %15 = vector.broadcast %cst_8 : f32 to vector<32x1xf32>
    %16 = arith.divf %14, %15 : vector<32x1xf32>
    %cst_9 = arith.constant 9.99999974E-6 : f32
    %17 = vector.broadcast %cst_9 : f32 to vector<32x1xf32>
    %18 = arith.addf %16, %17 : vector<32x1xf32>
    %19 = math.rsqrt %18 : vector<32x1xf32>
    %20 = vector.broadcast %19 : vector<32x1xf32> to vector<32x32xf32>
    %21 = arith.mulf %11, %20 : vector<32x32xf32>
    %c1 = arith.constant 1 : index
    %c0_10 = arith.constant 0 : index
    %22 = vector.load %arg3[%c1, %c0_10] : memref<3x32xf32, #tpu.memory_space<vmem>>, vector<1x32xf32>
    %23 = vector.broadcast %22 : vector<1x32xf32> to vector<32x32xf32>
    %24 = arith.mulf %21, %23 : vector<32x32xf32>
    %c2 = arith.constant 2 : index
    %c0_11 = arith.constant 0 : index
    %25 = vector.load %arg3[%c2, %c0_11] : memref<3x32xf32, #tpu.memory_space<vmem>>, vector<1x32xf32>
    %26 = vector.broadcast %25 : vector<1x32xf32> to vector<32x32xf32>
    %27 = arith.addf %24, %26 : vector<32x32xf32>
    %28 = arith.truncf %27 : vector<32x32xf32> to vector<32x32xbf16>
    %c0_12 = arith.constant 0 : index
    %c0_13 = arith.constant 0 : index
    %29 = vector.load %arg4[%c0_12, %c0_13] : memref<32x32xbf16, #tpu.memory_space<vmem>>, vector<32x32xbf16>
    tpu.vector_store %arg4[%c0_12, %c0_13], %28 {strides = array<i32>} : memref<32x32xbf16, #tpu.memory_space<vmem>>, vector<32x32xbf16>,
    return
  }
  func.func @transform_0(%arg0: i32) -> (i32, i32) {
    %c0_i32 = arith.constant 0 : i32
    %c0_i32_0 = arith.constant 0 : i32
    return %arg0, %c0_i32 : i32, i32
  }
  func.func @transform_1(%arg0: i32) -> (i32, i32) {
    %c0_i32 = arith.constant 0 : i32
    %c0_i32_0 = arith.constant 0 : i32
    %c0_i32_1 = arith.constant 0 : i32
    return %c0_i32, %c0_i32_0 : i32, i32
  }
  func.func @transform_2(%arg0: i32) -> (i32, i32) {
    %c0_i32 = arith.constant 0 : i32
    %c0_i32_0 = arith.constant 0 : i32
    %c0_i32_1 = arith.constant 0 : i32
    return %c0_i32, %c0_i32_0 : i32, i32
  }
  func.func @transform_3(%arg0: i32) -> (i32, i32) {
    %c0_i32 = arith.constant 0 : i32
    %c0_i32_0 = arith.constant 0 : i32
    return %arg0, %c0_i32 : i32, i32
  }
}

</mosaic_0001>

<llo_original>
// kernel: tpu_custom_call.1
$region0: #{tpu_custom_call.1}
  #allocation0 [shape = 'u32[]', space=smem, size = 0x4, offset = 0x4, fixed_abs, tag = 'smem constant byte address 0x4 - core index']
  #allocation1 [shape = 'u32[72,128]{1,0:T(1,128)}', space=vmem, size = 0x9000, scoped, tag = 'internal scratch']
  %s0 = inlined_call_operand.vmem [shape: bf16[32,196], index: 0, kind: input, shape index: {}]
  %s1 = inlined_call_operand.vmem [shape: bf16[196,32], index: 1, kind: input, shape index: {}]
  %s2 = inlined_call_operand.vmem [shape: f32[3,32], index: 2, kind: input, shape index: {}]
  %s3 = inlined_call_operand.hbm [shape: bf16[32,32], index: 3, kind: output, shape index: {}]
  %s4 = sld [smem:[#allocation0]]
  $region22: #{tpu_custom_call.1} parent=0
    _
  %s6 = ssub.s32 1, %s4
  %s7 = scalar_select 0, %s6, %s4
  $region1: #{tpu_custom_call.1} parent=0
    #allocation2 [shape = 'u8[8192]{0}', space=vmem, size = 0x2000, scoped, tag = 'output window, operand 0, single buffered']
    #allocation3 [shape = 's32[1]{0}', space=sflag, size = 0x4, scoped, tag = 'scoped memory for tpu_custom_call.1']
    %8 = vsyncpa [#allocation3], 0
    // Predicated region
    $region2: #{tpu_custom_call.1} parent=1 // pred_check
      _
    $region3: #{tpu_custom_call.1} parent=1 // pred_check_branch
      %10 = sbr.rel (0) target = $region5
    $region4: #{tpu_custom_call.1} parent=1 // pred_region
      _
    $region5: #{tpu_custom_call.1} parent=1 // pred_fallthru
      _
    // Predicated region
    $region6: #{tpu_custom_call.1} parent=1 // pred_check
      _
    $region7: #{tpu_custom_call.1} parent=1 // pred_check_branch
      %12 = sbr.rel (0) target = $region9
    $region8: #{tpu_custom_call.1} parent=1 // pred_region
      _
    $region9: #{tpu_custom_call.1} parent=1 // pred_fallthru
      _
    // Predicated region
    $region10: #{tpu_custom_call.1} parent=1 // pred_check
      _
    $region11: #{tpu_custom_call.1} parent=1 // pred_check_branch
      %14 = sbr.rel (0) target = $region13
    $region12: #{tpu_custom_call.1} parent=1 // pred_region
      _
    $region13: #{tpu_custom_call.1} parent=1 // pred_fallthru
      _
    %v16 = vld [vmem:[%s0] sm:$0xff]
    %v17 = vld [vmem:[%s0 + $0x8] sm:$0xff]
    %v18 = vld [vmem:[%s0 + $0x10] sm:$0xff]
    %v19 = vld [vmem:[%s0 + $0x18] sm:$0xff]
    %v20 = vld [vmem:[%s1] sm:$0xf]
    %v21 = vld [vmem:[%s1 + $0x4] sm:$0xf]
    %v22 = vld [vmem:[%s1 + $0x8] sm:$0xf]
    %v23 = vld [vmem:[%s1 + $0xc] sm:$0xf]
    %v24 = vld [vmem:[%s1 + $0x10] sm:$0xf]
    %v25 = vld [vmem:[%s1 + $0x14] sm:$0xf]
    %v26 = vld [vmem:[%s1 + $0x18] sm:$0xf]
    %v27 = vld [vmem:[%s1 + $0x1c] sm:$0xf]
    %v28 = vld [vmem:[%s1 + $0x20] sm:$0xf]
    %v29 = vld [vmem:[%s1 + $0x24] sm:$0xf]
    %v30 = vld [vmem:[%s1 + $0x28] sm:$0xf]
    %v31 = vld [vmem:[%s1 + $0x2c] sm:$0xf]
    %v32 = vld [vmem:[%s1 + $0x30] sm:$0xf]
    %v33 = vld [vmem:[%s1 + $0x34] sm:$0xf]
    %v34 = vld [vmem:[%s1 + $0x38] sm:$0xf]
    %v35 = vld [vmem:[%s1 + $0x3c] sm:$0xf]
    %v36 = vld [vmem:[%s1 + $0x40] sm:$0xf]
    %v37 = vld [vmem:[%s1 + $0x44] sm:$0xf]
    %v38 = vld [vmem:[%s1 + $0x48] sm:$0xf]
    %v39 = vld [vmem:[%s1 + $0x4c] sm:$0xf]
    %v40 = vld [vmem:[%s1 + $0x50] sm:$0xf]
    %v41 = vld [vmem:[%s1 + $0x54] sm:$0xf]
    %v42 = vld [vmem:[%s1 + $0x58] sm:$0xf]
    %v43 = vld [vmem:[%s1 + $0x5c] sm:$0xf]
    %v44 = vld [vmem:[%s1 + $0x60] sm:$0x3]
    %v45 = vld [vmem:[%s2] sm:$0x1]
    %v46 = vperm.slane %v45, 0
    %v51 = vunpack.c.l.b16 %v16
    %v52 = vunpack.c.h.b16 %v16
    %v53 = vunpack.c.l.b16 %v17
    %v54 = vunpack.c.h.b16 %v17
    %v55 = vunpack.c.l.b16 %v18
    %v56 = vunpack.c.h.b16 %v18
    %v57 = vunpack.c.l.b16 %v19
    %v58 = vunpack.c.h.b16 %v19
    %v59 = vpack.c.b16 %v53, %v51
    %v60 = vpack.c.b16 %v54, %v52
    %v61 = vpack.c.b16 %v57, %v55
    %v62 = vpack.c.b16 %v58, %v56
    %v90 = vunpack.c.l.b16 %v20
    %v91 = vunpack.c.l.b16 %v21
    %v92 = vunpack.c.l.b16 %v22
    %v93 = vunpack.c.l.b16 %v23
    %v94 = vunpack.c.l.b16 %v24
    %v95 = vunpack.c.l.b16 %v25
    %v96 = vunpack.c.l.b16 %v26
    %v97 = vunpack.c.l.b16 %v27
    %v98 = vunpack.c.l.b16 %v28
    %v99 = vunpack.c.l.b16 %v29
    %v100 = vunpack.c.l.b16 %v30
    %v101 = vunpack.c.l.b16 %v31
    %v102 = vunpack.c.l.b16 %v32
    %v103 = vunpack.c.l.b16 %v33
    %v104 = vunpack.c.l.b16 %v34
    %v105 = vunpack.c.l.b16 %v35
    %v106 = vunpack.c.l.b16 %v36
    %v107 = vunpack.c.l.b16 %v37
    %v108 = vunpack.c.l.b16 %v38
    %v109 = vunpack.c.l.b16 %v39
    %v110 = vunpack.c.l.b16 %v40
    %v111 = vunpack.c.l.b16 %v41
    %v112 = vunpack.c.l.b16 %v42
    %v113 = vunpack.c.l.b16 %v43
    %v114 = vunpack.c.l.b16 %v44
    %v115 = vpack.c.b16 %v91, %v90
    %v116 = vpack.c.b16 %v93, %v92
    %v117 = vpack.c.b16 %v95, %v94
    %v118 = vpack.c.b16 %v97, %v96
    %v119 = vpack.c.b16 %v99, %v98
    %v120 = vpack.c.b16 %v101, %v100
    %v121 = vpack.c.b16 %v103, %v102
    %v122 = vpack.c.b16 %v105, %v104
    %v123 = vpack.c.b16 %v107, %v106
    %v124 = vpack.c.b16 %v109, %v108
    %v125 = vpack.c.b16 %v111, %v110
    %v126 = vpack.c.b16 %v113, %v112
    %v127 = vpack.c.b16 %v114, %v114
    %vm140 = vcmask 556032
    %v142 = vsel %vm140, %v60, 0
    %v145 = vsel %vm140, %v62, 0
    %vm147 = vcmask 1041408
    %v149 = vsel %vm147, %v127, 0
    %151 = vmatpush.bf16.msra.mxu0 %v122
    %152 = vmatpush.bf16.msra.mxu0 %v121
    %153 = vmatpush.bf16.msra.mxu0 %v120
    %154 = vmatpush.bf16.msra.mxu0 %v119
    %155 = vmatpush.bf16.msra.mxu0 %v118
    %156 = vmatpush.bf16.msra.mxu0 %v117
    %157 = vmatpush.bf16.msra.mxu0 %v116
    %158 = vmatpush.bf16.msra.mxu0 %v115
    %159 = vmatmul.bf16.gmra.mxu0 %v59
    %v160 = vpop.f32.mrf.mxu0
    %v161 = vadd.f32 %v46, %v160
    %v162 = vpop.f32.mrf.mxu0
    %v163 = vadd.f32 %v46, %v162
    %164 = vmatmul.bf16.gmra.mxu0 %v61
    %v165 = vpop.f32.mrf.mxu0
    %v166 = vadd.f32 %v46, %v165
    %v167 = vpop.f32.mrf.mxu0
    %v168 = vadd.f32 %v46, %v167
    %169 = vdwg.mxu0
    %170 = vmatpush.bf16.msra.mxu0 0
    %171 = vmatpush.bf16.msra.mxu0 0
    %172 = vmatpush.bf16.msra.mxu0 0
    %173 = vmatpush.bf16.msra.mxu0 %v149
    %174 = vmatpush.bf16.msra.mxu0 %v126
    %175 = vmatpush.bf16.msra.mxu0 %v125
    %176 = vmatpush.bf16.msra.mxu0 %v124
    %177 = vmatpush.bf16.msra.mxu0 %v123
    %178 = vmatmul.bf16.gmra.mxu0 %v142
    %v179 = vpop.f32.mrf.mxu0
    %v180 = vadd.f32 %v161, %v179
    %v181 = vpop.f32.mrf.mxu0
    %v182 = vadd.f32 %v163, %v181
    %183 = vmatmul.bf16.gmra.mxu0 %v145
    %v184 = vpop.f32.mrf.mxu0
    %v185 = vadd.f32 %v166, %v184
    %v186 = vpop.f32.mrf.mxu0
    %v187 = vadd.f32 %v168, %v186
    %188 = vdwg.mxu0
    %vm189 = vcmask 261120
    %v190 = vsel %vm189, %v180, 0.0
    %191 = vadd.xlane.f32.xlu0 %v190
    %v192 = vpop.xlane.xlu0 %191
    %v193 = vsel %vm189, %v182, 0.0
    %194 = vadd.xlane.f32.xlu0 %v193
    %v195 = vpop.xlane.xlu0 %194
    %v196 = vsel %vm189, %v185, 0.0
    %197 = vadd.xlane.f32.xlu0 %v196
    %v198 = vpop.xlane.xlu0 %197
    %v199 = vsel %vm189, %v187, 0.0
    %200 = vadd.xlane.f32.xlu0 %v199
    %v201 = vpop.xlane.xlu0 %200
    %v202 = vrcp.pop 32.0
    %v203 = vmul.f32 32.0, %v202
    %v204 = vsub.f32 1.0, %v203
    %v205 = vmul.f32 %v202, %v204
    %v206 = vadd.f32 %v202, %v205
    %vm207 = vweird.f32 %v202
    %v208 = vsel %vm207, %v202, %v206
    %v209 = vmul.f32 %v192, %v208
    %v210 = vmul.f32 %v195, %v208
    %v211 = vmul.f32 %v198, %v208
    %v212 = vmul.f32 %v201, %v208
    %v213 = vsub.f32 %v180, %v209
    %v214 = vsub.f32 %v182, %v210
    %v215 = vsub.f32 %v185, %v211
    %v216 = vsub.f32 %v187, %v212
    %v217 = vmul.f32 %v213, %v213
    %v218 = vmul.f32 %v214, %v214
    %v219 = vmul.f32 %v215, %v215
    %v220 = vmul.f32 %v216, %v216
    %v221 = vsel %vm189, %v217, 0.0
    %222 = vadd.xlane.f32.xlu0 %v221
    %v223 = vpop.xlane.xlu0 %222
    %v224 = vsel %vm189, %v218, 0.0
    %225 = vadd.xlane.f32.xlu0 %v224
    %v226 = vpop.xlane.xlu0 %225
    %v227 = vsel %vm189, %v219, 0.0
    %228 = vadd.xlane.f32.xlu0 %v227
    %v229 = vpop.xlane.xlu0 %228
    %v230 = vsel %vm189, %v220, 0.0
    %231 = vadd.xlane.f32.xlu0 %v230
    %v232 = vpop.xlane.xlu0 %231
    %v233 = vmul.f32 %v223, %v208
    %v234 = vmul.f32 %v226, %v208
    %v235 = vmul.f32 %v229, %v208
    %v236 = vmul.f32 %v232, %v208
    %v237 = vadd.f32 %v233, 1e-05
    %v238 = vadd.f32 %v234, 1e-05
    %v239 = vadd.f32 %v235, 1e-05
    %v240 = vadd.f32 %v236, 1e-05
    %v241 = vrsqrt.pop %v237
    %v242 = vmul.f32 %v241, %v237
    %v243 = vmul.f32 %v242, %v241
    %v244 = vmul.f32 0.5, %v243
    %v245 = vsub.f32 1.5, %v244
    %v246 = vmul.f32 %v241, %v245
    %vm247 = vweird.f32 %v237
    %vm248 = vweird.f32 %v241
    %vm249 = vmor %vm247, %vm248
    %v250 = vsel %vm249, %v241, %v246
    %v251 = vrsqrt.pop %v238
    %v252 = vmul.f32 %v251, %v238
    %v253 = vmul.f32 %v252, %v251
    %v254 = vmul.f32 0.5, %v253
    %v255 = vsub.f32 1.5, %v254
    %v256 = vmul.f32 %v251, %v255
    %vm257 = vweird.f32 %v238
    %vm258 = vweird.f32 %v251
    %vm259 = vmor %vm257, %vm258
    %v260 = vsel %vm259, %v251, %v256
    %v261 = vrsqrt.pop %v239
    %v262 = vmul.f32 %v261, %v239
    %v263 = vmul.f32 %v262, %v261
    %v264 = vmul.f32 0.5, %v263
    %v265 = vsub.f32 1.5, %v264
    %v266 = vmul.f32 %v261, %v265
    %vm267 = vweird.f32 %v239
    %vm268 = vweird.f32 %v261
    %vm269 = vmor %vm267, %vm268
    %v270 = vsel %vm269, %v261, %v266
    %v271 = vrsqrt.pop %v240
    %v272 = vmul.f32 %v271, %v240
    %v273 = vmul.f32 %v272, %v271
    %v274 = vmul.f32 0.5, %v273
    %v275 = vsub.f32 1.5, %v274
    %v276 = vmul.f32 %v271, %v275
    %vm277 = vweird.f32 %v240
    %vm278 = vweird.f32 %v271
    %vm279 = vmor %vm277, %vm278
    %v280 = vsel %vm279, %v271, %v276
    %v281 = vmul.f32 %v213, %v250
    %v282 = vmul.f32 %v214, %v260
    %v283 = vmul.f32 %v215, %v270
    %v284 = vmul.f32 %v216, %v280
    %v285 = vld [vmem:[%s2 + $0x1] sm:$0x1]
    %v286 = vperm.slane %v285, 0
    %v287 = vmul.f32 %v281, %v286
    %v288 = vmul.f32 %v282, %v286
    %v289 = vmul.f32 %v283, %v286
    %v290 = vmul.f32 %v284, %v286
    %v291 = vld [vmem:[%s2 + $0x2] sm:$0x1]
    %v292 = vperm.slane %v291, 0
    %v293 = vadd.f32 %v287, %v292
    %v294 = vadd.f32 %v288, %v292
    %v295 = vadd.f32 %v289, %v292
    %v296 = vadd.f32 %v290, %v292
    %v297 = vpack.c.bf16 %v293, %v293
    %v298 = vpack.c.bf16 %v294, %v294
    %v299 = vpack.c.bf16 %v295, %v295
    %v300 = vpack.c.bf16 %v296, %v296
    %vm301 = vcmask 257024
    %302 = vst.msk [vmem:[#allocation2] sm:$0xf] %vm301, %v297
    %303 = vst.msk [vmem:[#allocation2 + $0x4] sm:$0xf] %vm301, %v298
    %304 = vst.msk [vmem:[#allocation2 + $0x8] sm:$0xf] %vm301, %v299
    %305 = vst.msk [vmem:[#allocation2 + $0xc] sm:$0xf] %vm301, %v300
    // Predicated region
    $region14: #{tpu_custom_call.1} parent=1 // pred_check
      _
    $region15: #{tpu_custom_call.1} parent=1 // pred_check_branch
      %307 = sbr.rel (0) target = $region17
    $region16: #{tpu_custom_call.1} parent=1 // pred_region
      %309 = vsyncadd [#allocation3], 0
      %s310 = sshll.u32 [#allocation2], 4
      %s311 = int_to_ptr.vmem [resolvable:$true] %s310
      %s312 = sshll.u32 %s3, 4
      %s313 = int_to_ptr.hbm [resolvable:$true] %s312
      %318 = dma.vmem_to_hbm [thread:$0]  %s311, 256, %s313, [#allocation3], 64, 64, 4
    $region17: #{tpu_custom_call.1} parent=1 // pred_fallthru
      _
    // Predicated region
    $region18: #{tpu_custom_call.1} parent=1 // pred_check
      _
    $region19: #{tpu_custom_call.1} parent=1 // pred_check_branch
      %320 = sbr.rel (0) target = $region21
    $region20: #{tpu_custom_call.1} parent=1 // pred_region
      %322 = dma.done [#allocation3], 256
    $region21: #{tpu_custom_call.1} parent=1 // pred_fallthru
      _
    %323 = vsyncpa [#allocation3], 1

</llo_original>
